<compile_context>
chip_gen: v7x
topology: tpu7x:2x2x1
jax: 0.10.0
libtpu: 0.0.40
codegen_flags: <defaults>
</compile_context>

<pallas_src>
import jax
import jax.numpy as jnp
from jax.experimental import pallas as pl
from jax.experimental.pallas import tpu as pltpu

_LANE = 128           # vreg lane width
_SUBLANE = 8          # vreg sublane count (f32)
_MAX_TILE_ROWS = 512  # (512, 128) f32 tile = 256 KiB/buffer -> well under v7x's 64 MiB VMEM


def _linear_1x1_kernel(w_ref, x_ref, y_ref):
    # w_ref: (1,) f32 scalar weight in SMEM
    # x_ref: (tile_rows, 128) block in VMEM
    # y_ref: (tile_rows, 128) block in VMEM (same dtype as input)
    w = w_ref[0]  # single scalar read; broadcast happens once per tile on the VPU
    y_ref[...] = (x_ref[...].astype(jnp.float32) * w).astype(y_ref.dtype)


def linear_1x1(x: jax.Array, weight: jax.Array) -> jax.Array:
    """y = x @ weight.T for weight of shape (1, 1), bias-free.  x: (..., 1)."""
    assert x.ndim >= 1 and x.shape[-1] == 1, "Linear(1, 1) expects trailing dim == 1"
    assert weight.shape == (1, 1)
    out_shape = x.shape
    out_dtype = x.dtype
    n = x.size
    w_scalar = weight.reshape((1,)).astype(jnp.float32)

    if n == 0:
        return jnp.zeros(out_shape, dtype=out_dtype)

    # --- Lane-dense layout: flatten (..., 1) -> padded (rows, 128) slab -------------
    x_flat = x.reshape(n)
    # Pad N up to a multiple of 8*128 so the slab satisfies the (8, 128) constraint.
    block = _SUBLANE * _LANE
    padded_n = ((n + block - 1) // block) * block
    rows = padded_n // _LANE
    tile_rows = min(_MAX_TILE_ROWS, rows)
    # Re-pad so tile_rows divides rows exactly (no partial tiles / masked stores).
    padded_rows = pl.cdiv(rows, tile_rows) * tile_rows
    padded_n = padded_rows * _LANE
    if padded_n != n:
        x_flat = jnp.pad(x_flat, (0, padded_n - n))
    x2d = x_flat.reshape(padded_rows, _LANE)

    grid = (padded_rows // tile_rows,)
    y2d = pl.pallas_call(
        _linear_1x1_kernel,
        out_shape=jax.ShapeDtypeStruct((padded_rows, _LANE), out_dtype),
        grid=grid,
        in_specs=[
            pl.BlockSpec(memory_space=pltpu.SMEM),               # scalar weight
            pl.BlockSpec((tile_rows, _LANE), lambda i: (i, 0)),  # row-tile of x
        ],
        out_specs=pl.BlockSpec((tile_rows, _LANE), lambda i: (i, 0)),
        compiler_params=pltpu.CompilerParams(
            dimension_semantics=("parallel",),  # shard independent row tiles across TCs
        ),
    )(w_scalar, x2d)

    return y2d.reshape(padded_n)[:n].reshape(out_shape)


class PallasModule:
    """Mirror of the PyTorch Module: Linear(1, 1, bias=False) applied to env['x']."""

    def __init__(self, key):
        # Same shape/init range as torch.nn.Linear(1, 1, bias=False).weight: U(-1, 1).
        self.weight = jax.random.uniform(
            key, (1, 1), dtype=jnp.float32, minval=-1.0, maxval=1.0
        )

    def __call__(self, env: dict) -> dict:
        x = env["x"]
        if x.ndim == 0:
            x = x.reshape(1, 1)
        env["y"] = linear_1x1(x, self.weight)
        return env


if __name__ == "__main__":
    key = jax.random.PRNGKey(0)
    k_w, k_x = jax.random.split(key)

    module = PallasModule(k_w)

    # Small batch consistent with the module's forward: x of shape (N, 1).
    n = 256
    x = jax.random.normal(k_x, (n, 1), dtype=jnp.float32)
    env = {"x": x}

    out_env = module(env)
    y = jax.block_until_ready(out_env["y"])

    # Reference: plain-JAX x @ W^T
    y_ref = x @ module.weight.T
    assert y.shape == (n, 1)
    assert y.dtype == x.dtype
    assert jnp.allclose(y, y_ref, atol=1e-6), "mismatch vs reference (pallas path)"

    # Even smaller batch (single padded tile through the kernel).
    x_small = jax.random.normal(jax.random.PRNGKey(1), (8, 1), dtype=jnp.float32)
    y_small = jax.block_until_ready(module({"x": x_small})["y"])
    assert y_small.shape == (8, 1)
    assert jnp.allclose(y_small, x_small @ module.weight.T, atol=1e-6)

    # Scalar-input branch (0-d x -> reshape to (1, 1)), as in the torch forward.
    y_scalar = jax.block_until_ready(module({"x": jnp.float32(2.5)})["y"])
    assert y_scalar.shape == (1, 1)
    assert jnp.allclose(y_scalar, jnp.float32(2.5) * module.weight, atol=1e-6)

    print("KERNEL_OK")
</pallas_src>

<mosaic_0001>
module attributes {stable_mosaic.version = 11 : i64} {
  func.func @_linear_1x1_kernel(%arg0: i32, %arg1: memref<1xf32, #tpu.memory_space<smem>>, %arg2: memref<8x128xf32, #tpu.memory_space<vmem>>, %arg3: memref<8x128xf32, #tpu.memory_space<vmem>>) attributes {dimension_semantics = [#tpu.dimension_semantics<parallel>], iteration_bounds = array<i64: 1>, scalar_prefetch = 0 : i64, scratch_operands = 0 : i64, tpu.core_type = #tpu.core_type<tc>, window_params = [{transform_indices = @transform_0, window_bounds = array<i64: 1>}, {transform_indices = @transform_1, window_bounds = array<i64: 8, 128>}, {transform_indices = @transform_2, window_bounds = array<i64: 8, 128>}]} {
    %c0 = arith.constant 0 : index
    %0 = memref.load %arg1[%c0] : memref<1xf32, #tpu.memory_space<smem>>
    %c0_0 = arith.constant 0 : index
    %c0_1 = arith.constant 0 : index
    %1 = vector.load %arg2[%c0_0, %c0_1] : memref<8x128xf32, #tpu.memory_space<vmem>>, vector<8x128xf32>
    %2 = vector.broadcast %0 : f32 to vector<8x128xf32>
    %3 = arith.mulf %1, %2 : vector<8x128xf32>
    %c0_2 = arith.constant 0 : index
    %c0_3 = arith.constant 0 : index
    %4 = vector.load %arg3[%c0_2, %c0_3] : memref<8x128xf32, #tpu.memory_space<vmem>>, vector<8x128xf32>
    tpu.vector_store %arg3[%c0_2, %c0_3], %3 {strides = array<i32>} : memref<8x128xf32, #tpu.memory_space<vmem>>, vector<8x128xf32>,
    return
  }
  func.func @transform_0(%arg0: i32) -> i32 {
    %c0_i32 = arith.constant 0 : i32
    %c0_i32_0 = arith.constant 0 : i32
    return %c0_i32 : i32
  }
  func.func @transform_1(%arg0: i32) -> (i32, i32) {
    %c0_i32 = arith.constant 0 : i32
    %c0_i32_0 = arith.constant 0 : i32
    return %arg0, %c0_i32 : i32, i32
  }
  func.func @transform_2(%arg0: i32) -> (i32, i32) {
    %c0_i32 = arith.constant 0 : i32
    %c0_i32_0 = arith.constant 0 : i32
    return %arg0, %c0_i32 : i32, i32
  }
}

</mosaic_0001>

<llo_original>
// kernel: tpu_custom_call.1
$region0: #{tpu_custom_call.1}
  #allocation0 [shape = 'u32[]', space=smem, size = 0x4, offset = 0x4, fixed_abs, tag = 'smem constant byte address 0x4 - core index']
  #allocation1 [shape = 'u32[144,128]{1,0:T(1,128)}', space=vmem, size = 0x12000, scoped, tag = 'internal scratch']
  #allocation2 [shape = 'f32[1]{0:T(128)S(6)}', space=smem, size = 0x200, scoped, tag = 'scoped memory for tpu_custom_call.1']
  %s0 = inlined_call_operand.<no memory space> [shape: f32[1], index: 0, kind: input, shape index: {}]
  %s1 = inlined_call_operand.hbm [shape: f32[8,128], index: 1, kind: input, shape index: {}]
  %s2 = inlined_call_operand.hbm [shape: f32[8,128], index: 2, kind: output, shape index: {}]
  %s3 = sld [smem:[#allocation0]]
  $region22: #{tpu_custom_call.1} parent=0
    _
  %s5 = ssub.s32 1, %s3
  %s6 = scalar_select 0, %s5, %s3
  %7 = sst [smem:[#allocation2]] %s0
  $region1: #{tpu_custom_call.1} parent=0
    #allocation3 [shape = 'u8[4096]{0}', space=vmem, size = 0x1000, scoped, tag = 'input window, operand 1, single buffered']
    #allocation4 [shape = 's32[1]{0}', space=sflag, size = 0x4, scoped, tag = 'scoped memory for tpu_custom_call.1']
    #allocation5 [shape = 's32[1]{0}', space=sflag, size = 0x4, scoped, tag = 'scoped memory for tpu_custom_call.1']
    #allocation6 [shape = 'u8[4096]{0}', space=vmem, size = 0x1000, scoped, tag = 'output window, operand 0, single buffered']
    %8 = vsyncpa [#allocation4], 0
    %9 = vsyncpa [#allocation5], 0
    // Predicated region
    $region2: #{tpu_custom_call.1} parent=1 // pred_check
      _
    $region3: #{tpu_custom_call.1} parent=1 // pred_check_branch
      %11 = sbr.rel (0) target = $region5
    $region4: #{tpu_custom_call.1} parent=1 // pred_region
      _
    $region5: #{tpu_custom_call.1} parent=1 // pred_fallthru
      _
    // Predicated region
    $region6: #{tpu_custom_call.1} parent=1 // pred_check
      _
    $region7: #{tpu_custom_call.1} parent=1 // pred_check_branch
      %13 = sbr.rel (0) target = $region9
    $region8: #{tpu_custom_call.1} parent=1 // pred_region
      %s15 = ssub.s32 128, 128
      %16 = vsyncadd [#allocation4], %s15
      %s18 = sshll.u32 [#allocation3], 4
      %s19 = int_to_ptr.vmem [resolvable:$true] %s18
      %21 = dma.hbm_to_vmem [thread:$0]  %s1, 128, %s19, [#allocation4]
    $region9: #{tpu_custom_call.1} parent=1 // pred_fallthru
      _
    // Predicated region
    $region10: #{tpu_custom_call.1} parent=1 // pred_check
      _
    $region11: #{tpu_custom_call.1} parent=1 // pred_check_branch
      %23 = sbr.rel (0) target = $region13
    $region12: #{tpu_custom_call.1} parent=1 // pred_region
      %24 = dma.done [#allocation4], 128
    $region13: #{tpu_custom_call.1} parent=1 // pred_fallthru
      _
    %s25 = sld [smem:[#allocation2]]
    %v26 = vld [vmem:[#allocation3] sm:$0xff]
    %v27 = vstv %s25
    %v28 = vmul.f32 %v26, %v27
    %29 = vst [vmem:[#allocation6] sm:$0xff] %v28
    // Predicated region
    $region14: #{tpu_custom_call.1} parent=1 // pred_check
      _
    $region15: #{tpu_custom_call.1} parent=1 // pred_check_branch
      %31 = sbr.rel (0) target = $region17
    $region16: #{tpu_custom_call.1} parent=1 // pred_region
      %s33 = ssub.s32 128, 128
      %34 = vsyncadd [#allocation5], %s33
      %s36 = sshll.u32 [#allocation6], 4
      %s37 = int_to_ptr.vmem [resolvable:$true] %s36
      %39 = dma.vmem_to_hbm [thread:$0]  %s37, 128, %s2, [#allocation5]
    $region17: #{tpu_custom_call.1} parent=1 // pred_fallthru
      _
    // Predicated region
    $region18: #{tpu_custom_call.1} parent=1 // pred_check
      _
    $region19: #{tpu_custom_call.1} parent=1 // pred_check_branch
      %41 = sbr.rel (0) target = $region21
    $region20: #{tpu_custom_call.1} parent=1 // pred_region
      %42 = dma.done [#allocation5], 128
    $region21: #{tpu_custom_call.1} parent=1 // pred_fallthru
      _
    %43 = vsyncpa [#allocation4], 1
    %44 = vsyncpa [#allocation5], 1

</llo_original>
